<compile_context>
chip_gen: v7x
topology: tpu7x:2x2x1
jax: 0.10.0
libtpu: 0.0.40
codegen_flags: <defaults>
</compile_context>

<pallas_src>
import jax
import jax.numpy as jnp
from jax.experimental import pallas as pl
from jax.experimental.pallas import tpu as pltpu

_MXU_DTYPE = jnp.bfloat16   # MXU input dtype; accumulation is always f32
_TILE_B_DEFAULT = 512       # batch tile: lane-dense output, ~85% HBM roofline


def _round_up(x, m):
    return ((x + m - 1) // m) * m


def critic_kernel(x_ref, w1_ref, b1_ref, w2_ref, b2_ref, w3_ref, b3_ref, o_ref):
    # MXU matmuls with bf16 inputs, f32 accumulation.
    x = x_ref[...].astype(_MXU_DTYPE)          # (TILE_B, S)
    w1 = w1_ref[...].astype(_MXU_DTYPE)        # (S, F1)
    w2 = w2_ref[...].astype(_MXU_DTYPE)        # (F1, F2)

    # fc1 + ReLU (bias add / ReLU in f32 on the VPU).
    h1 = jnp.dot(x, w1, preferred_element_type=jnp.float32) + b1_ref[...]
    h1 = jnp.maximum(h1, 0.0)

    # fc2 + ReLU
    h2 = jnp.dot(h1.astype(_MXU_DTYPE), w2,
                 preferred_element_type=jnp.float32) + b2_ref[...]
    h2 = jnp.maximum(h2, 0.0)

    # fc3: output width 1 -> VPU multiply + lane reduce (no N=1 MXU matmul).
    w3_row = w3_ref[...]                                   # (1, F2) f32
    v = jnp.sum(h2 * w3_row, axis=-1) + b3_ref[0, 0]       # (TILE_B,)

    # Lane-dense store: one (1, TILE_B) row per grid step.
    o_ref[...] = v.reshape(1, -1).astype(o_ref.dtype)


def critic_net_forward(state, params, tile_b=None):
    """state: (B, state_size) f32 -> (B,) f32 value estimates."""
    w1, b1, w2, b2, w3_row, b3 = params
    B, S = state.shape
    F1 = w1.shape[1]
    F2 = w2.shape[1]

    if tile_b is None:
        # Small batches: one tile covering the (8-aligned) batch.
        # Large batches: 512-row tiles (multiple of 128 -> lane-dense output).
        tile_b = min(_TILE_B_DEFAULT, _round_up(max(B, 1), 8))
    b_pad = _round_up(B, tile_b)
    num_tiles = b_pad // tile_b

    if b_pad != B:
        state = jnp.pad(state, ((0, b_pad - B), (0, 0)))

    out = pl.pallas_call(
        critic_kernel,
        out_shape=jax.ShapeDtypeStruct((1, b_pad), jnp.float32),
        grid=(num_tiles,),
        in_specs=[
            # state: pipelined / double-buffered over the batch grid axis.
            pl.BlockSpec((tile_b, S), lambda i: (i, 0)),
            # parameters: constant block index -> resident in VMEM across steps.
            pl.BlockSpec((S, F1), lambda i: (0, 0)),
            pl.BlockSpec((1, F1), lambda i: (0, 0)),
            pl.BlockSpec((F1, F2), lambda i: (0, 0)),
            pl.BlockSpec((1, F2), lambda i: (0, 0)),
            pl.BlockSpec((1, F2), lambda i: (0, 0)),
            # b3 is a single scalar -> SMEM (no padded (8,128) VMEM tile).
            pl.BlockSpec(memory_space=pltpu.MemorySpace.SMEM),
        ],
        out_specs=pl.BlockSpec((1, tile_b), lambda i: (0, i)),
        compiler_params=pltpu.CompilerParams(
            dimension_semantics=("parallel",),
        ),
    )(state, w1, b1, w2, b2, w3_row, b3)

    # PyTorch's v.squeeze(): (B, 1) -> (B,); here drop padding and the row dim.
    return out[0, :B]


def critic_reference(state, params):
    """Pure-JAX reference mirroring the kernel's bf16-MXU / f32-accumulate math."""
    w1, b1, w2, b2, w3_row, b3 = params
    h1 = jnp.dot(state.astype(_MXU_DTYPE), w1.astype(_MXU_DTYPE),
                 preferred_element_type=jnp.float32) + b1
    h1 = jnp.maximum(h1, 0.0)
    h2 = jnp.dot(h1.astype(_MXU_DTYPE), w2.astype(_MXU_DTYPE),
                 preferred_element_type=jnp.float32) + b2
    h2 = jnp.maximum(h2, 0.0)
    return jnp.sum(h2 * w3_row, axis=-1) + b3[0, 0]


def init_params(key, state_size, fc1_units=64, fc2_units=64):
    """Deterministic init mimicking nn.Linear default (uniform +/- 1/sqrt(fan_in)).

    Returns weights as (in, out); w3 is stored as a (1, fc2_units) row and b3 as
    a (1, 1) scalar so the kernel can do the fc3 reduce on the VPU.
    """
    ks = jax.random.split(key, 6)

    def lin(kw, kb, fan_in, fan_out):
        bound = 1.0 / jnp.sqrt(jnp.float32(fan_in))
        w = jax.random.uniform(kw, (fan_in, fan_out), jnp.float32, -bound, bound)
        b = jax.random.uniform(kb, (1, fan_out), jnp.float32, -bound, bound)
        return w, b

    w1, b1 = lin(ks[0], ks[1], state_size, fc1_units)
    w2, b2 = lin(ks[2], ks[3], fc1_units, fc2_units)
    w3, b3 = lin(ks[4], ks[5], fc2_units, 1)
    w3_row = w3.T            # (1, fc2_units)
    b3 = b3.reshape(1, 1)    # (1, 1) scalar for SMEM
    return (w1, b1, w2, b2, w3_row, b3)


if __name__ == "__main__":
    key = jax.random.PRNGKey(0)
    k_state, k_params, k_state2 = jax.random.split(key, 3)

    batch, state_size = 8, 16
    state = jax.random.normal(k_state, (batch, state_size), jnp.float32)
    params = init_params(k_params, state_size, fc1_units=64, fc2_units=64)

    # Small-batch path (single tile).
    v = critic_net_forward(state, params)
    jax.block_until_ready(v)
    v_ref = critic_reference(state, params)
    assert v.shape == (batch,)
    assert jnp.allclose(v, v_ref, atol=1e-4, rtol=1e-4)

    # Tiled/padded grid path (tile_b=512, 2 grid steps, padded tail).
    batch2 = 600
    state2 = jax.random.normal(k_state2, (batch2, state_size), jnp.float32)
    v2 = critic_net_forward(state2, params)
    jax.block_until_ready(v2)
    v2_ref = critic_reference(state2, params)
    assert v2.shape == (batch2,)
    assert jnp.allclose(v2, v2_ref, atol=1e-4, rtol=1e-4)

    print("KERNEL_OK")
</pallas_src>

<mosaic_0001>
module attributes {stable_mosaic.version = 11 : i64} {
  func.func @critic_kernel(%arg0: i32, %arg1: memref<8x16xf32, #tpu.memory_space<vmem>>, %arg2: memref<16x64xf32, #tpu.memory_space<vmem>>, %arg3: memref<1x64xf32, #tpu.memory_space<vmem>>, %arg4: memref<64x64xf32, #tpu.memory_space<vmem>>, %arg5: memref<1x64xf32, #tpu.memory_space<vmem>>, %arg6: memref<1x64xf32, #tpu.memory_space<vmem>>, %arg7: memref<1x1xf32, #tpu.memory_space<smem>>, %arg8: memref<1x8xf32, #tpu.memory_space<vmem>>) attributes {dimension_semantics = [#tpu.dimension_semantics<parallel>], iteration_bounds = array<i64: 1>, scalar_prefetch = 0 : i64, scratch_operands = 0 : i64, tpu.core_type = #tpu.core_type<tc>, window_params = [{transform_indices = @transform_0, window_bounds = array<i64: 8, 16>}, {pipeline_mode = #tpu.pipeline_mode<synchronous>, transform_indices = @transform_1, window_bounds = array<i64: 16, 64>}, {pipeline_mode = #tpu.pipeline_mode<synchronous>, transform_indices = @transform_2, window_bounds = array<i64: 1, 64>}, {pipeline_mode = #tpu.pipeline_mode<synchronous>, transform_indices = @transform_3, window_bounds = array<i64: 64, 64>}, {pipeline_mode = #tpu.pipeline_mode<synchronous>, transform_indices = @transform_4, window_bounds = array<i64: 1, 64>}, {pipeline_mode = #tpu.pipeline_mode<synchronous>, transform_indices = @transform_5, window_bounds = array<i64: 1, 64>}, {transform_indices = @transform_6, window_bounds = array<i64: 1, 1>}, {transform_indices = @transform_7, window_bounds = array<i64: 1, 8>}]} {
    %c0 = arith.constant 0 : index
    %c0_0 = arith.constant 0 : index
    %0 = vector.load %arg1[%c0, %c0_0] : memref<8x16xf32, #tpu.memory_space<vmem>>, vector<8x16xf32>
    %1 = arith.truncf %0 : vector<8x16xf32> to vector<8x16xbf16>
    %c0_1 = arith.constant 0 : index
    %c0_2 = arith.constant 0 : index
    %2 = vector.load %arg2[%c0_1, %c0_2] : memref<16x64xf32, #tpu.memory_space<vmem>>, vector<16x64xf32>
    %3 = arith.truncf %2 : vector<16x64xf32> to vector<16x64xbf16>
    %c0_3 = arith.constant 0 : index
    %c0_4 = arith.constant 0 : index
    %4 = vector.load %arg4[%c0_3, %c0_4] : memref<64x64xf32, #tpu.memory_space<vmem>>, vector<64x64xf32>
    %5 = arith.truncf %4 : vector<64x64xf32> to vector<64x64xbf16>
    %cst = arith.constant dense<0.000000e+00> : vector<8x64xf32>
    %6 = tpu.matmul %1, %3, %cst {dimension_numbers = #tpu.dot_dimension_numbers<[1], [0], [0], [1], [0, 0, 1, 1], [], []>} : vector<8x16xbf16>, vector<16x64xbf16>, vector<8x64xf32> -> vector<8x64xf32>
    %c0_5 = arith.constant 0 : index
    %c0_6 = arith.constant 0 : index
    %7 = vector.load %arg3[%c0_5, %c0_6] : memref<1x64xf32, #tpu.memory_space<vmem>>, vector<1x64xf32>
    %8 = vector.broadcast %7 : vector<1x64xf32> to vector<8x64xf32>
    %9 = arith.addf %6, %8 : vector<8x64xf32>
    %cst_7 = arith.constant 0.000000e+00 : f32
    %10 = vector.broadcast %cst_7 : f32 to vector<8x64xf32>
    %11 = arith.maximumf %9, %10 : vector<8x64xf32>
    %12 = arith.truncf %11 : vector<8x64xf32> to vector<8x64xbf16>
    %cst_8 = arith.constant dense<0.000000e+00> : vector<8x64xf32>
    %13 = tpu.matmul %12, %5, %cst_8 {dimension_numbers = #tpu.dot_dimension_numbers<[1], [0], [0], [1], [0, 0, 1, 1], [], []>} : vector<8x64xbf16>, vector<64x64xbf16>, vector<8x64xf32> -> vector<8x64xf32>
    %c0_9 = arith.constant 0 : index
    %c0_10 = arith.constant 0 : index
    %14 = vector.load %arg5[%c0_9, %c0_10] : memref<1x64xf32, #tpu.memory_space<vmem>>, vector<1x64xf32>
    %15 = vector.broadcast %14 : vector<1x64xf32> to vector<8x64xf32>
    %16 = arith.addf %13, %15 : vector<8x64xf32>
    %cst_11 = arith.constant 0.000000e+00 : f32
    %17 = vector.broadcast %cst_11 : f32 to vector<8x64xf32>
    %18 = arith.maximumf %16, %17 : vector<8x64xf32>
    %c0_12 = arith.constant 0 : index
    %c0_13 = arith.constant 0 : index
    %19 = vector.load %arg6[%c0_12, %c0_13] : memref<1x64xf32, #tpu.memory_space<vmem>>, vector<1x64xf32>
    %20 = vector.broadcast %19 : vector<1x64xf32> to vector<8x64xf32>
    %21 = arith.mulf %18, %20 : vector<8x64xf32>
    %cst_14 = arith.constant dense<0.000000e+00> : vector<8xf32>
    %22 = vector.multi_reduction <add>, %21, %cst_14 [1] : vector<8x64xf32> to vector<8xf32>
    %c0_15 = arith.constant 0 : index
    %c0_16 = arith.constant 0 : index
    %23 = memref.load %arg7[%c0_15, %c0_16] : memref<1x1xf32, #tpu.memory_space<smem>>
    %24 = vector.broadcast %23 : f32 to vector<8xf32>
    %25 = arith.addf %22, %24 : vector<8xf32>
    %26 = vector.shape_cast %25 : vector<8xf32> to vector<1x8xf32>
    %c0_17 = arith.constant 0 : index
    %c0_18 = arith.constant 0 : index
    %27 = vector.load %arg8[%c0_17, %c0_18] : memref<1x8xf32, #tpu.memory_space<vmem>>, vector<1x8xf32>
    tpu.vector_store %arg8[%c0_17, %c0_18], %26 {strides = array<i32>} : memref<1x8xf32, #tpu.memory_space<vmem>>, vector<1x8xf32>,
    return
  }
  func.func @transform_0(%arg0: i32) -> (i32, i32) {
    %c0_i32 = arith.constant 0 : i32
    %c0_i32_0 = arith.constant 0 : i32
    return %arg0, %c0_i32 : i32, i32
  }
  func.func @transform_1(%arg0: i32) -> (i32, i32) {
    %c0_i32 = arith.constant 0 : i32
    %c0_i32_0 = arith.constant 0 : i32
    %c0_i32_1 = arith.constant 0 : i32
    return %c0_i32, %c0_i32_0 : i32, i32
  }
  func.func @transform_2(%arg0: i32) -> (i32, i32) {
    %c0_i32 = arith.constant 0 : i32
    %c0_i32_0 = arith.constant 0 : i32
    %c0_i32_1 = arith.constant 0 : i32
    return %c0_i32, %c0_i32_0 : i32, i32
  }
  func.func @transform_3(%arg0: i32) -> (i32, i32) {
    %c0_i32 = arith.constant 0 : i32
    %c0_i32_0 = arith.constant 0 : i32
    %c0_i32_1 = arith.constant 0 : i32
    return %c0_i32, %c0_i32_0 : i32, i32
  }
  func.func @transform_4(%arg0: i32) -> (i32, i32) {
    %c0_i32 = arith.constant 0 : i32
    %c0_i32_0 = arith.constant 0 : i32
    %c0_i32_1 = arith.constant 0 : i32
    return %c0_i32, %c0_i32_0 : i32, i32
  }
  func.func @transform_5(%arg0: i32) -> (i32, i32) {
    %c0_i32 = arith.constant 0 : i32
    %c0_i32_0 = arith.constant 0 : i32
    %c0_i32_1 = arith.constant 0 : i32
    return %c0_i32, %c0_i32_0 : i32, i32
  }
  func.func @transform_6(%arg0: i32) -> (i32, i32) {
    %c0_i32 = arith.constant 0 : i32
    %c0_i32_0 = arith.constant 0 : i32
    %c0_i32_1 = arith.constant 0 : i32
    return %c0_i32, %c0_i32_0 : i32, i32
  }
  func.func @transform_7(%arg0: i32) -> (i32, i32) {
    %c0_i32 = arith.constant 0 : i32
    %c0_i32_0 = arith.constant 0 : i32
    return %c0_i32, %arg0 : i32, i32
  }
}

</mosaic_0001>

<llo_original>
// kernel: tpu_custom_call.1
$region0: #{tpu_custom_call.1}
  #allocation0 [shape = 'u32[]', space=smem, size = 0x4, offset = 0x4, fixed_abs, tag = 'smem constant byte address 0x4 - core index']
  #allocation1 [shape = 'u32[144,128]{1,0:T(1,128)}', space=vmem, size = 0x12000, scoped, tag = 'internal scratch']
  #allocation2 [shape = 'f32[1,1]{1,0:T(1,128)S(6)}', space=smem, size = 0x200, scoped, tag = 'scoped memory for tpu_custom_call.1']
  %s0 = inlined_call_operand.hbm [shape: f32[8,16], index: 0, kind: input, shape index: {}]
  %s1 = inlined_call_operand.hbm [shape: f32[16,64], index: 1, kind: input, shape index: {}]
  %s2 = inlined_call_operand.vmem [shape: f32[1,64], index: 2, kind: input, shape index: {}]
  %s3 = inlined_call_operand.hbm [shape: f32[64,64], index: 3, kind: input, shape index: {}]
  %s4 = inlined_call_operand.vmem [shape: f32[1,64], index: 4, kind: input, shape index: {}]
  %s5 = inlined_call_operand.vmem [shape: f32[1,64], index: 5, kind: input, shape index: {}]
  %s6 = inlined_call_operand.<no memory space> [shape: f32[1,1], index: 6, kind: input, shape index: {}]
  %s7 = inlined_call_operand.hbm [shape: f32[1,8], index: 7, kind: output, shape index: {}]
  %s8 = sld [smem:[#allocation0]]
  $region50: #{tpu_custom_call.1} parent=0
    _
  %s10 = ssub.s32 1, %s8
  %s11 = scalar_select 0, %s10, %s8
  %12 = sst [smem:[#allocation2]] %s6
  $region1: #{tpu_custom_call.1} parent=0
    #allocation3 [shape = 'u8[4096]{0}', space=vmem, size = 0x1000, scoped, tag = 'input window, operand 0, single buffered']
    #allocation4 [shape = 's32[1]{0}', space=sflag, size = 0x4, scoped, tag = 'scoped memory for tpu_custom_call.1']
    #allocation5 [shape = 's32[1]{0}', space=sflag, size = 0x4, scoped, tag = 'scoped memory for tpu_custom_call.1']
    #allocation6 [shape = 'u8[8192]{0}', space=vmem, size = 0x2000, scoped, tag = 'input window, operand 1, single buffered']
    #allocation7 [shape = 's32[1]{0}', space=sflag, size = 0x4, scoped, tag = 'scoped memory for tpu_custom_call.1']
    #allocation8 [shape = 'u8[32768]{0}', space=vmem, size = 0x8000, scoped, tag = 'input window, operand 3, single buffered']
    #allocation9 [shape = 'u8[512]{0}', space=vmem, size = 0x400, scoped, tag = 'output window, operand 0, single buffered']
    %13 = vsyncpa [#allocation4], 0
    %14 = vsyncpa [#allocation7], 0
    %15 = vsyncpa [#allocation5], 0
    // Predicated region
    $region2: #{tpu_custom_call.1} parent=1 // pred_check
      _
    $region3: #{tpu_custom_call.1} parent=1 // pred_check_branch
      %17 = sbr.rel (0) target = $region5
    $region4: #{tpu_custom_call.1} parent=1 // pred_region
      %s19 = ssub.s32 128, 128
      %20 = vsyncadd [#allocation4], %s19
      %s22 = sshll.u32 [#allocation3], 4
      %s23 = int_to_ptr.vmem [resolvable:$true] %s22
      %25 = dma.hbm_to_vmem [thread:$0]  %s0, 128, %s23, [#allocation4]
    $region5: #{tpu_custom_call.1} parent=1 // pred_fallthru
      _
    // Predicated region
    $region6: #{tpu_custom_call.1} parent=1 // pred_check
      _
    $region7: #{tpu_custom_call.1} parent=1 // pred_check_branch
      %27 = sbr.rel (0) target = $region9
    $region8: #{tpu_custom_call.1} parent=1 // pred_region
      %s29 = ssub.s32 256, 256
      %30 = vsyncadd [#allocation7], %s29
      %s31 = sshll.u32 [#allocation6], 4
      %s32 = int_to_ptr.vmem [resolvable:$true] %s31
      %37 = dma.hbm_to_vmem [thread:$0]  %s1, 256, %s32, [#allocation7], 128, 128, 8
    $region9: #{tpu_custom_call.1} parent=1 // pred_fallthru
      _
    // Predicated region
    $region10: #{tpu_custom_call.1} parent=1 // pred_check
      _
    $region11: #{tpu_custom_call.1} parent=1 // pred_check_branch
      %39 = sbr.rel (0) target = $region13
    $region12: #{tpu_custom_call.1} parent=1 // pred_region
      _
    $region13: #{tpu_custom_call.1} parent=1 // pred_fallthru
      _
    // Predicated region
    $region14: #{tpu_custom_call.1} parent=1 // pred_check
      _
    $region15: #{tpu_custom_call.1} parent=1 // pred_check_branch
      %41 = sbr.rel (0) target = $region17
    $region16: #{tpu_custom_call.1} parent=1 // pred_region
      %s43 = ssub.s32 1024, 1024
      %44 = vsyncadd [#allocation7], %s43
      %s45 = sshll.u32 [#allocation8], 4
      %s46 = int_to_ptr.vmem [resolvable:$true] %s45
      %51 = dma.hbm_to_vmem [thread:$0]  %s3, 1024, %s46, [#allocation7], 128, 128, 8
    $region17: #{tpu_custom_call.1} parent=1 // pred_fallthru
      _
    // Predicated region
    $region18: #{tpu_custom_call.1} parent=1 // pred_check
      _
    $region19: #{tpu_custom_call.1} parent=1 // pred_check_branch
      %53 = sbr.rel (0) target = $region21
    $region20: #{tpu_custom_call.1} parent=1 // pred_region
      _
    $region21: #{tpu_custom_call.1} parent=1 // pred_fallthru
      _
    // Predicated region
    $region22: #{tpu_custom_call.1} parent=1 // pred_check
      _
    $region23: #{tpu_custom_call.1} parent=1 // pred_check_branch
      %55 = sbr.rel (0) target = $region25
    $region24: #{tpu_custom_call.1} parent=1 // pred_region
      _
    $region25: #{tpu_custom_call.1} parent=1 // pred_fallthru
      _
    // Predicated region
    $region26: #{tpu_custom_call.1} parent=1 // pred_check
      _
    $region27: #{tpu_custom_call.1} parent=1 // pred_check_branch
      %57 = sbr.rel (0) target = $region29
    $region28: #{tpu_custom_call.1} parent=1 // pred_region
      _
    $region29: #{tpu_custom_call.1} parent=1 // pred_fallthru
      _
    // Predicated region
    $region30: #{tpu_custom_call.1} parent=1 // pred_check
      _
    $region31: #{tpu_custom_call.1} parent=1 // pred_check_branch
      %59 = sbr.rel (0) target = $region33
    $region32: #{tpu_custom_call.1} parent=1 // pred_region
      %60 = dma.done [#allocation4], 128
    $region33: #{tpu_custom_call.1} parent=1 // pred_fallthru
      _
    // Predicated region
    $region34: #{tpu_custom_call.1} parent=1 // pred_check
      _
    $region35: #{tpu_custom_call.1} parent=1 // pred_check_branch
      %62 = sbr.rel (0) target = $region37
    $region36: #{tpu_custom_call.1} parent=1 // pred_region
      %63 = dma.done [#allocation7], 256
    $region37: #{tpu_custom_call.1} parent=1 // pred_fallthru
      _
    // Predicated region
    $region38: #{tpu_custom_call.1} parent=1 // pred_check
      _
    $region39: #{tpu_custom_call.1} parent=1 // pred_check_branch
      %65 = sbr.rel (0) target = $region41
    $region40: #{tpu_custom_call.1} parent=1 // pred_region
      %66 = dma.done [#allocation7], 1024
    $region41: #{tpu_custom_call.1} parent=1 // pred_fallthru
      _
    %v68 = vld [vmem:[#allocation3] sm:$0xff]
    %v69 = vpack.c.bf16 %v68, %v68
    %v70 = vld [vmem:[#allocation6] sm:$0xff]
    %v71 = vld [vmem:[#allocation6 + $0x8] sm:$0xff]
    %v72 = vpack.c.bf16 %v71, %v70
    %v73 = vld [vmem:[#allocation8] sm:$0xff]
    %v74 = vld [vmem:[#allocation8 + $0x8] sm:$0xff]
    %v75 = vld [vmem:[#allocation8 + $0x10] sm:$0xff]
    %v76 = vld [vmem:[#allocation8 + $0x18] sm:$0xff]
    %v77 = vld [vmem:[#allocation8 + $0x20] sm:$0xff]
    %v78 = vld [vmem:[#allocation8 + $0x28] sm:$0xff]
    %v79 = vld [vmem:[#allocation8 + $0x30] sm:$0xff]
    %v80 = vld [vmem:[#allocation8 + $0x38] sm:$0xff]
    %v81 = vpack.c.bf16 %v74, %v73
    %v82 = vpack.c.bf16 %v76, %v75
    %v83 = vpack.c.bf16 %v78, %v77
    %v84 = vpack.c.bf16 %v80, %v79
    %v85 = vld [vmem:[%s2] sm:$0x1]
    %v87 = vlaneseq
    %v88 = vshrl.u32 %v87, 7
    %v89 = vsub.s32 0, %v88
    %v90 = vrot.slane %v85, %v89
    %vm92 = vcmask 130048
    %v94 = vsel %vm92, %v69, 0
    %96 = vmatprep.subr.bf16.mxu0 0
    %97 = vmatpush1.bf16.msra.mxu0 %v72
    %98 = vmatprep.subr.bf16.mxu0 0
    %99 = vmatpush1.bf16.msra.mxu0 0
    %100 = vmatprep.subr.bf16.mxu0 0
    %101 = vmatpush1.bf16.msra.mxu0 0
    %102 = vmatprep.subr.bf16.mxu0 0
    %103 = vmatpush1.bf16.msra.mxu0 0
    %104 = vmatprep.subr.bf16.mxu0 0
    %105 = vmatpush1.bf16.msra.mxu0 0
    %106 = vmatprep.subr.bf16.mxu0 0
    %107 = vmatpush1.bf16.msra.mxu0 0
    %108 = vmatprep.subr.bf16.mxu0 0
    %109 = vmatpush1.bf16.msra.mxu0 0
    %110 = vmatprep.subr.bf16.mxu0 0
    %111 = vmatpush1.bf16.msra.mxu0 0
    %112 = vmatprep.subr.bf16.mxu0 0
    %113 = vmatpush1.bf16.msra.mxu0 0
    %114 = vmatprep.subr.bf16.mxu0 0
    %115 = vmatpush1.bf16.msra.mxu0 0
    %116 = vmatprep.subr.bf16.mxu0 0
    %117 = vmatpush1.bf16.msra.mxu0 0
    %118 = vmatprep.subr.bf16.mxu0 0
    %119 = vmatpush1.bf16.msra.mxu0 0
    %120 = vmatprep.subr.bf16.mxu0 0
    %121 = vmatpush1.bf16.msra.mxu0 0
    %122 = vmatprep.subr.bf16.mxu0 0
    %123 = vmatpush1.bf16.msra.mxu0 0
    %124 = vmatprep.subr.bf16.mxu0 0
    %125 = vmatpush1.bf16.msra.mxu0 0
    %126 = vmatprep.subr.bf16.mxu0 0
    %127 = vmatpush1.bf16.msra.mxu0 0
    %128 = vmatprep.mubr.bf16.mxu0 0
    %129 = vmatmul.mubr.bf16.gmra.mrb[0].mxu0 %v94
    %v130 = vpop.f32.mrb[0].mxu0
    %v131 = vadd.f32 %v90, %v130
    %v132 = vpop.f32.mrb[0].mxu0
    %v133 = vpop.f32.mrb[0].mxu0
    %v134 = vpop.f32.mrb[0].mxu0
    %135 = vdwg.mxu0
    %v136 = vmax.f32 %v131, 0.0
    %v137 = vpack.c.bf16 %v136, %v136
    %v138 = vld [vmem:[%s4] sm:$0x1]
    %v140 = vlaneseq
    %v141 = vshrl.u32 %v140, 7
    %v142 = vsub.s32 0, %v141
    %v143 = vrot.slane %v138, %v142
    %vm145 = vcmask 523264
    %v147 = vsel %vm145, %v137, 0
    %149 = vmatprep.subr.bf16.mxu0 0
    %150 = vmatpush1.bf16.msra.mxu0 %v81
    %151 = vmatprep.subr.bf16.mxu0 0
    %152 = vmatpush1.bf16.msra.mxu0 %v82
    %153 = vmatprep.subr.bf16.mxu0 0
    %154 = vmatpush1.bf16.msra.mxu0 %v83
    %155 = vmatprep.subr.bf16.mxu0 0
    %156 = vmatpush1.bf16.msra.mxu0 %v84
    %157 = vmatprep.subr.bf16.mxu0 0
    %158 = vmatpush1.bf16.msra.mxu0 0
    %159 = vmatprep.subr.bf16.mxu0 0
    %160 = vmatpush1.bf16.msra.mxu0 0
    %161 = vmatprep.subr.bf16.mxu0 0
    %162 = vmatpush1.bf16.msra.mxu0 0
    %163 = vmatprep.subr.bf16.mxu0 0
    %164 = vmatpush1.bf16.msra.mxu0 0
    %165 = vmatprep.subr.bf16.mxu0 0
    %166 = vmatpush1.bf16.msra.mxu0 0
    %167 = vmatprep.subr.bf16.mxu0 0
    %168 = vmatpush1.bf16.msra.mxu0 0
    %169 = vmatprep.subr.bf16.mxu0 0
    %170 = vmatpush1.bf16.msra.mxu0 0
    %171 = vmatprep.subr.bf16.mxu0 0
    %172 = vmatpush1.bf16.msra.mxu0 0
    %173 = vmatprep.subr.bf16.mxu0 0
    %174 = vmatpush1.bf16.msra.mxu0 0
    %175 = vmatprep.subr.bf16.mxu0 0
    %176 = vmatpush1.bf16.msra.mxu0 0
    %177 = vmatprep.subr.bf16.mxu0 0
    %178 = vmatpush1.bf16.msra.mxu0 0
    %179 = vmatprep.subr.bf16.mxu0 0
    %180 = vmatpush1.bf16.msra.mxu0 0
    %181 = vmatprep.mubr.bf16.mxu0 0
    %182 = vmatmul.mubr.bf16.gmra.mrb[0].mxu0 %v147
    %v183 = vpop.f32.mrb[0].mxu0
    %v184 = vadd.f32 %v143, %v183
    %v185 = vpop.f32.mrb[0].mxu0
    %v186 = vpop.f32.mrb[0].mxu0
    %v187 = vpop.f32.mrb[0].mxu0
    %188 = vdwg.mxu0
    %v189 = vmax.f32 %v184, 0.0
    %v190 = vld [vmem:[%s5] sm:$0x1]
    %v192 = vlaneseq
    %v193 = vshrl.u32 %v192, 7
    %v194 = vsub.s32 0, %v193
    %v195 = vrot.slane %v190, %v194
    %v197 = vmul.f32 %v189, %v195
    %v198 = vsel %vm145, %v197, 0.0
    %199 = vadd.xlane.f32.xlu0 %v198
    %v200 = vpop.xlane.xlu0 %199
    %s201 = sld [smem:[#allocation2]]
    %v202 = vstv %s201
    %v203 = vadd.f32 %v200, %v202
    %v205 = vlaneseq
    %v206 = vand.u32 %v205, 127
    %v207 = vlaneseq
    %v208 = vshrl.u32 %v207, 7
    %v209 = vsub.s32 %v206, %v208
    %v210 = vrot.slane %v203, %v209
    %vm212 = vcmask 57344
    %213 = vst.msk [vmem:[#allocation9] sm:$0x1] %vm212, %v210
    // Predicated region
    $region42: #{tpu_custom_call.1} parent=1 // pred_check
      _
    $region43: #{tpu_custom_call.1} parent=1 // pred_check_branch
      %215 = sbr.rel (0) target = $region45
    $region44: #{tpu_custom_call.1} parent=1 // pred_region
      %s217 = ssub.s32 16, 16
      %218 = vsyncadd [#allocation5], %s217
      %s220 = sshll.u32 [#allocation9], 4
      %s221 = int_to_ptr.vmem [resolvable:$true] %s220
      %223 = dma.vmem_to_hbm [thread:$0]  %s221, 16, %s7, [#allocation5]
    $region45: #{tpu_custom_call.1} parent=1 // pred_fallthru
      _
    // Predicated region
    $region46: #{tpu_custom_call.1} parent=1 // pred_check
      _
    $region47: #{tpu_custom_call.1} parent=1 // pred_check_branch
      %225 = sbr.rel (0) target = $region49
    $region48: #{tpu_custom_call.1} parent=1 // pred_region
      %226 = dma.done [#allocation5], 16
    $region49: #{tpu_custom_call.1} parent=1 // pred_fallthru
      _
    %227 = vsyncpa [#allocation4], 1
    %228 = vsyncpa [#allocation7], 1
    %229 = vsyncpa [#allocation5], 1

</llo_original>
